<compile_context>
chip_gen: v7x
topology: tpu7x:2x2x1
jax: 0.10.0
libtpu: 0.0.40
codegen_flags: <defaults>
</compile_context>

<pallas_src>
import jax
import jax.numpy as jnp
from jax.experimental import pallas as pl
from jax.experimental.pallas import tpu as pltpu


def _round_up(a: int, b: int) -> int:
    return (a + b - 1) // b * b


def _make_elastic_linear_kernel(use_layernorm: bool, activation: str,
                                fixed: bool, eps: float, n_valid: int,
                                n_pad: int, single_k: bool):
    """Kernel body specialized on static module config + padded N + K tiling."""
    if activation not in ("relu", "silu", "identity"):
        raise ValueError(f"unknown activation: {activation}")

    def kernel(dims_ref, x_ref, w_ref, *rest):
        rest = list(rest)
        if use_layernorm:
            gamma_ref, beta_ref = rest[0], rest[1]
            rest = rest[2:]
            bias_ref = None
        else:
            bias_ref = rest[0]
            rest = rest[1:]
            gamma_ref = beta_ref = None
        o_ref = rest[0]
        acc_ref = None if single_k else rest[1]

        # bf16 x bf16 -> f32 on the MXU.
        part = jnp.dot(x_ref[...], w_ref[...],
                       preferred_element_type=jnp.float32)

        def epilogue(out):
            if use_layernorm:
                if n_valid == n_pad:
                    mean = jnp.mean(out, axis=-1, keepdims=True)
                    cent = out - mean
                    var = jnp.mean(cent * cent, axis=-1, keepdims=True)
                else:
                    # LayerNorm statistics only over the real (unpadded) columns.
                    valid = jax.lax.broadcasted_iota(
                        jnp.int32, out.shape, 1) < n_valid
                    inv_n = 1.0 / float(n_valid)
                    mean = jnp.sum(jnp.where(valid, out, 0.0), axis=-1,
                                   keepdims=True) * inv_n
                    cent = jnp.where(valid, out - mean, 0.0)
                    var = jnp.sum(cent * cent, axis=-1, keepdims=True) * inv_n
                out = cent * jax.lax.rsqrt(var + eps)
                out = out * gamma_ref[...] + beta_ref[...]
            else:
                out = out + bias_ref[...]

            if activation == "relu":
                out = jnp.maximum(out, 0.0)
            elif activation == "silu":
                out = out * jax.nn.sigmoid(out)
            # "identity": nothing.

            if not fixed:
                # CleverMaskGenerator: cols >= dims_in_use are zeroed.
                col = jax.lax.broadcasted_iota(jnp.int32, out.shape, 1)
                out = jnp.where(col < dims_ref[0], out, 0.0)
            return out.astype(o_ref.dtype)

        if single_k:
            # One K block: no accumulator scratch, fuse epilogue immediately.
            o_ref[...] = epilogue(part)
        else:
            k = pl.program_id(1)

            @pl.when(k == 0)
            def _init():
                acc_ref[...] = part

            @pl.when(k != 0)
            def _acc():
                acc_ref[...] += part

            @pl.when(k == pl.num_programs(1) - 1)
            def _finish():
                o_ref[...] = epilogue(acc_ref[...])

    return kernel


def elastic_linear(x, w, *, dims_in_use=None, gamma=None, beta=None, bias=None,
                   activation="relu", use_layernorm=True, fixed=False,
                   eps=1e-5, block_m=256, block_k=512,
                   weight_vmem_budget_bytes=8 * 1024 * 1024, out_dtype=None):
    """JAX/Pallas equivalent of ElasticLinear.forward.

    Args:
      x:      (..., K) input.
      w:      (K, N) weight (PyTorch weight.T), N == max_dims_or_dims.
      gamma/beta: (N,) LayerNorm affine params (used iff use_layernorm).
      bias:   (N,) linear bias (used iff not use_layernorm).
      dims_in_use: active output dims; int or int32 scalar array.  Passed to
        the kernel via scalar prefetch, so changing it does not recompile.
    """
    orig_shape = x.shape
    K = orig_shape[-1]
    x2 = x.reshape(-1, K)
    M = x2.shape[0]
    Kw, N = w.shape
    assert K == Kw, (K, Kw)
    out_dtype = x.dtype if out_dtype is None else out_dtype

    if not fixed:
        assert dims_in_use is not None, "dims_in_use required when not fixed"
        if isinstance(dims_in_use, int):
            assert dims_in_use <= N, (
                "'dims_in_use' must be <= 'max_dims_or_dims', "
                f"got {dims_in_use} vs {N}")
    else:
        dims_in_use = N  # unused by the kernel, keeps the signature uniform.
    dims_arr = jnp.asarray(dims_in_use, jnp.int32).reshape(1)

    # ---- Tiling / padding (everything (8,128)-aligned, zero-padded). ----
    N_pad = _round_up(N, 128)
    K_128 = _round_up(K, 128)
    if K_128 * N_pad * 2 <= weight_vmem_budget_bytes:
        tk = K_128              # whole (padded) K in one block -> W resident.
    else:
        tk = _round_up(min(block_k, K_128), 128)
    K_pad = _round_up(K, tk)

    M_8 = _round_up(M, 8)
    tm = block_m if M_8 > block_m else M_8
    M_pad = _round_up(M, tm)

    grid = (M_pad // tm, K_pad // tk)
    single_k = grid[1] == 1

    # ---- Pad + cast operands (bf16 MXU feed, f32 accumulation). ----
    x_p = x2
    if (M_pad, K_pad) != (M, K):
        x_p = jnp.pad(x2, ((0, M_pad - M), (0, K_pad - K)))
    w_p = w
    if (K_pad, N_pad) != (K, N):
        w_p = jnp.pad(w, ((0, K_pad - K), (0, N_pad - N)))
    x_p = x_p.astype(jnp.bfloat16)
    w_p = w_p.astype(jnp.bfloat16)

    def _vec(v, default):
        v = default if v is None else jnp.asarray(v)
        v = v.astype(jnp.float32).reshape(1, N)
        if N_pad != N:
            v = jnp.pad(v, ((0, 0), (0, N_pad - N)))
        return v

    in_arrays = [x_p, w_p]
    x_spec = pl.BlockSpec((tm, tk), lambda i, k, dims: (i, k))
    w_spec = pl.BlockSpec((tk, N_pad), lambda i, k, dims: (k, 0))
    vec_spec = pl.BlockSpec((1, N_pad), lambda i, k, dims: (0, 0))
    in_specs = [x_spec, w_spec]

    if use_layernorm:
        in_arrays += [_vec(gamma, jnp.ones((N,), jnp.float32)),
                      _vec(beta, jnp.zeros((N,), jnp.float32))]
        in_specs += [vec_spec, vec_spec]
    else:
        in_arrays += [_vec(bias, jnp.zeros((N,), jnp.float32))]
        in_specs += [vec_spec]

    out_spec = pl.BlockSpec((tm, N_pad), lambda i, k, dims: (i, 0))
    scratch = [] if single_k else [pltpu.VMEM((tm, N_pad), jnp.float32)]

    # VMEM budget for this tiling (double-buffered blocks + accumulator).
    out_size = jnp.dtype(out_dtype).itemsize
    step_bytes = (2 * tm * tk * 2 + 2 * tk * N_pad * 2
                  + 2 * tm * N_pad * out_size
                  + (0 if single_k else tm * N_pad * 4)
                  + 6 * N_pad * 4)
    vmem_limit = int(min(64 * 2**20, max(32 * 2**20, 2 * step_bytes)))

    kernel = _make_elastic_linear_kernel(use_layernorm, activation, fixed, eps,
                                         N, N_pad, single_k)

    out_pad = pl.pallas_call(
        kernel,
        out_shape=jax.ShapeDtypeStruct((M_pad, N_pad), out_dtype),
        grid_spec=pltpu.PrefetchScalarGridSpec(
            num_scalar_prefetch=1,
            grid=grid,
            in_specs=in_specs,
            out_specs=out_spec,
            scratch_shapes=scratch,
        ),
        compiler_params=pltpu.CompilerParams(
            dimension_semantics=("parallel", "arbitrary"),
            vmem_limit_bytes=vmem_limit,
        ),
    )(dims_arr, *in_arrays)

    out2 = out_pad[:M, :N]
    return out2.reshape(orig_shape[:-1] + (N,))


def _elastic_linear_ref(x, w, *, dims_in_use=None, gamma=None, beta=None,
                        bias=None, activation="relu", use_layernorm=True,
                        fixed=False, eps=1e-5):
    """Pure-JAX reference (same bf16 matmul precision as the kernel)."""
    out = jnp.dot(x.astype(jnp.bfloat16), w.astype(jnp.bfloat16),
                  preferred_element_type=jnp.float32)
    N = w.shape[1]
    if use_layernorm:
        mean = jnp.mean(out, axis=-1, keepdims=True)
        var = jnp.mean(jnp.square(out - mean), axis=-1, keepdims=True)
        out = (out - mean) * jax.lax.rsqrt(var + eps)
        out = out * jnp.asarray(gamma, jnp.float32) + jnp.asarray(beta, jnp.float32)
    else:
        out = out + jnp.asarray(bias, jnp.float32)
    if activation == "relu":
        out = jnp.maximum(out, 0.0)
    elif activation == "silu":
        out = out * jax.nn.sigmoid(out)
    if not fixed:
        mask = (jnp.arange(N) < dims_in_use).astype(jnp.float32)
        out = out * mask
    return out.astype(x.dtype)


if __name__ == "__main__":
    key = jax.random.PRNGKey(0)
    keys = jax.random.split(key, 12)

    def check(out, ref, masked_from=None):
        out = jax.block_until_ready(out)
        assert out.shape == ref.shape, (out.shape, ref.shape)
        assert bool(jnp.allclose(out, ref, rtol=5e-3, atol=5e-3))
        if masked_from is not None:
            assert bool(jnp.all(out[..., masked_from:] == 0.0))

    # ---- Config 1: layernorm + relu, supernet (masked), N multiple of 128 ----
    B, K_IN, MAX_DIMS, DIMS = 8, 32, 128, 96
    x1 = jax.random.normal(keys[0], (B, K_IN), jnp.float32)
    w1 = jax.random.normal(keys[1], (K_IN, MAX_DIMS), jnp.float32) / jnp.sqrt(K_IN)
    g1 = 1.0 + 0.1 * jax.random.normal(keys[2], (MAX_DIMS,), jnp.float32)
    b1 = 0.1 * jax.random.normal(keys[3], (MAX_DIMS,), jnp.float32)
    o1 = elastic_linear(x1, w1, dims_in_use=DIMS, gamma=g1, beta=b1,
                        activation="relu", use_layernorm=True, fixed=False)
    r1 = _elastic_linear_ref(x1, w1, dims_in_use=DIMS, gamma=g1, beta=b1,
                             activation="relu", use_layernorm=True, fixed=False)
    check(o1, r1, masked_from=DIMS)

    # ---- Config 2: bias (no LN) + silu, masked, non-128 N (padded lanes) ----
    B2, K2, N2, D2 = 16, 64, 96, 80
    x2 = jax.random.normal(keys[4], (B2, K2), jnp.float32)
    w2 = jax.random.normal(keys[5], (K2, N2), jnp.float32) / jnp.sqrt(K2)
    bias2 = 0.1 * jax.random.normal(keys[6], (N2,), jnp.float32)
    o2 = elastic_linear(x2, w2, dims_in_use=D2, bias=bias2,
                        activation="silu", use_layernorm=False, fixed=False)
    r2 = _elastic_linear_ref(x2, w2, dims_in_use=D2, bias=bias2,
                             activation="silu", use_layernorm=False, fixed=False)
    check(o2, r2, masked_from=D2)

    # ---- Config 3: 3-D input, fixed subnet, identity, multi-K accumulator ----
    x3 = jax.random.normal(keys[7], (2, 24, 512), jnp.float32)
    w3 = jax.random.normal(keys[8], (512, 128), jnp.float32) / jnp.sqrt(512)
    g3 = 1.0 + 0.1 * jax.random.normal(keys[9], (128,), jnp.float32)
    b3 = 0.1 * jax.random.normal(keys[10], (128,), jnp.float32)
    o3 = elastic_linear(x3, w3, gamma=g3, beta=b3, activation="identity",
                        use_layernorm=True, fixed=True,
                        block_k=128, weight_vmem_budget_bytes=0)  # force K tiling
    r3 = _elastic_linear_ref(x3, w3, gamma=g3, beta=b3, activation="identity",
                             use_layernorm=True, fixed=True)
    check(o3, r3)

    # ---- Config 4: layernorm with padded N (masked LN statistics path) ----
    B4, K4, N4, D4 = 8, 32, 96, 64
    x4 = jax.random.normal(keys[11], (B4, K4), jnp.float32)
    w4 = jax.random.normal(keys[0], (K4, N4), jnp.float32) / jnp.sqrt(K4)
    g4 = 1.0 + 0.1 * jax.random.normal(keys[1], (N4,), jnp.float32)
    b4 = 0.1 * jax.random.normal(keys[2], (N4,), jnp.float32)
    o4 = elastic_linear(x4, w4, dims_in_use=D4, gamma=g4, beta=b4,
                        activation="relu", use_layernorm=True, fixed=False)
    r4 = _elastic_linear_ref(x4, w4, dims_in_use=D4, gamma=g4, beta=b4,
                             activation="relu", use_layernorm=True, fixed=False)
    check(o4, r4, masked_from=D4)

    print("KERNEL_OK")
</pallas_src>

<mosaic_0001>
module attributes {stable_mosaic.version = 11 : i64} {
  func.func @kernel(%arg0: i32, %arg1: i32, %arg2: memref<1xi32, #tpu.memory_space<smem>>, %arg3: memref<8x128xbf16, #tpu.memory_space<vmem>>, %arg4: memref<128x128xbf16, #tpu.memory_space<vmem>>, %arg5: memref<1x128xf32, #tpu.memory_space<vmem>>, %arg6: memref<1x128xf32, #tpu.memory_space<vmem>>, %arg7: memref<8x128xf32, #tpu.memory_space<vmem>>) attributes {dimension_semantics = [#tpu.dimension_semantics<parallel>, #tpu.dimension_semantics<arbitrary>], iteration_bounds = array<i64: 1, 1>, scalar_prefetch = 1 : i64, scratch_operands = 0 : i64, tpu.core_type = #tpu.core_type<tc>, window_params = [{transform_indices = @transform_0, window_bounds = array<i64: 8, 128>}, {transform_indices = @transform_1, window_bounds = array<i64: 128, 128>}, {pipeline_mode = #tpu.pipeline_mode<synchronous>, transform_indices = @transform_2, window_bounds = array<i64: 1, 128>}, {pipeline_mode = #tpu.pipeline_mode<synchronous>, transform_indices = @transform_3, window_bounds = array<i64: 1, 128>}, {transform_indices = @transform_4, window_bounds = array<i64: 8, 128>}]} {
    %c0 = arith.constant 0 : index
    %c0_0 = arith.constant 0 : index
    %0 = vector.load %arg3[%c0, %c0_0] : memref<8x128xbf16, #tpu.memory_space<vmem>>, vector<8x128xbf16>
    %c0_1 = arith.constant 0 : index
    %c0_2 = arith.constant 0 : index
    %1 = vector.load %arg4[%c0_1, %c0_2] : memref<128x128xbf16, #tpu.memory_space<vmem>>, vector<128x128xbf16>
    %cst = arith.constant dense<0.000000e+00> : vector<8x128xf32>
    %2 = tpu.matmul %0, %1, %cst {dimension_numbers = #tpu.dot_dimension_numbers<[1], [0], [0], [1], [0, 0, 1, 1], [], []>} : vector<8x128xbf16>, vector<128x128xbf16>, vector<8x128xf32> -> vector<8x128xf32>
    %cst_3 = arith.constant dense<0.000000e+00> : vector<8xf32>
    %3 = vector.multi_reduction <add>, %2, %cst_3 [1] : vector<8x128xf32> to vector<8xf32>
    %4 = vector.shape_cast %3 : vector<8xf32> to vector<8x1xf32>
    %cst_4 = arith.constant 1.280000e+02 : f32
    %5 = vector.broadcast %cst_4 : f32 to vector<8x1xf32>
    %6 = arith.divf %4, %5 : vector<8x1xf32>
    %7 = vector.broadcast %6 : vector<8x1xf32> to vector<8x128xf32>
    %8 = arith.subf %2, %7 : vector<8x128xf32>
    %9 = arith.mulf %8, %8 : vector<8x128xf32>
    %cst_5 = arith.constant dense<0.000000e+00> : vector<8xf32>
    %10 = vector.multi_reduction <add>, %9, %cst_5 [1] : vector<8x128xf32> to vector<8xf32>
    %11 = vector.shape_cast %10 : vector<8xf32> to vector<8x1xf32>
    %cst_6 = arith.constant 1.280000e+02 : f32
    %12 = vector.broadcast %cst_6 : f32 to vector<8x1xf32>
    %13 = arith.divf %11, %12 : vector<8x1xf32>
    %cst_7 = arith.constant 9.99999974E-6 : f32
    %14 = vector.broadcast %cst_7 : f32 to vector<8x1xf32>
    %15 = arith.addf %13, %14 : vector<8x1xf32>
    %16 = math.rsqrt %15 : vector<8x1xf32>
    %17 = vector.broadcast %16 : vector<8x1xf32> to vector<8x128xf32>
    %18 = arith.mulf %8, %17 : vector<8x128xf32>
    %c0_8 = arith.constant 0 : index
    %c0_9 = arith.constant 0 : index
    %19 = vector.load %arg5[%c0_8, %c0_9] : memref<1x128xf32, #tpu.memory_space<vmem>>, vector<1x128xf32>
    %20 = vector.broadcast %19 : vector<1x128xf32> to vector<8x128xf32>
    %21 = arith.mulf %18, %20 : vector<8x128xf32>
    %c0_10 = arith.constant 0 : index
    %c0_11 = arith.constant 0 : index
    %22 = vector.load %arg6[%c0_10, %c0_11] : memref<1x128xf32, #tpu.memory_space<vmem>>, vector<1x128xf32>
    %23 = vector.broadcast %22 : vector<1x128xf32> to vector<8x128xf32>
    %24 = arith.addf %21, %23 : vector<8x128xf32>
    %cst_12 = arith.constant 0.000000e+00 : f32
    %25 = vector.broadcast %cst_12 : f32 to vector<8x128xf32>
    %26 = arith.maximumf %24, %25 : vector<8x128xf32>
    %27 = tpu.iota {dimensions = array<i32: 1>} : vector<8x128xi32>
    %c0_13 = arith.constant 0 : index
    %28 = memref.load %arg2[%c0_13] : memref<1xi32, #tpu.memory_space<smem>>
    %29 = vector.broadcast %28 : i32 to vector<8x128xi32>
    %30 = arith.cmpi slt, %27, %29 : vector<8x128xi32>
    %cst_14 = arith.constant 0.000000e+00 : f32
    %31 = vector.broadcast %cst_14 : f32 to vector<8x128xf32>
    %32 = arith.select %30, %26, %31 : vector<8x128xi1>, vector<8x128xf32>
    %c0_15 = arith.constant 0 : index
    %c0_16 = arith.constant 0 : index
    %33 = vector.load %arg7[%c0_15, %c0_16] : memref<8x128xf32, #tpu.memory_space<vmem>>, vector<8x128xf32>
    tpu.vector_store %arg7[%c0_15, %c0_16], %32 {strides = array<i32>} : memref<8x128xf32, #tpu.memory_space<vmem>>, vector<8x128xf32>,
    return
  }
  func.func @transform_0(%arg0: i32, %arg1: i32, %arg2: memref<1xi32, #tpu.memory_space<smem>>) -> (i32, i32) {
    %c0_i32 = arith.constant 0 : i32
    return %arg0, %arg1 : i32, i32
  }
  func.func @transform_1(%arg0: i32, %arg1: i32, %arg2: memref<1xi32, #tpu.memory_space<smem>>) -> (i32, i32) {
    %c0_i32 = arith.constant 0 : i32
    %c0_i32_0 = arith.constant 0 : i32
    return %arg1, %c0_i32 : i32, i32
  }
  func.func @transform_2(%arg0: i32, %arg1: i32, %arg2: memref<1xi32, #tpu.memory_space<smem>>) -> (i32, i32) {
    %c0_i32 = arith.constant 0 : i32
    %c0_i32_0 = arith.constant 0 : i32
    %c0_i32_1 = arith.constant 0 : i32
    return %c0_i32, %c0_i32_0 : i32, i32
  }
  func.func @transform_3(%arg0: i32, %arg1: i32, %arg2: memref<1xi32, #tpu.memory_space<smem>>) -> (i32, i32) {
    %c0_i32 = arith.constant 0 : i32
    %c0_i32_0 = arith.constant 0 : i32
    %c0_i32_1 = arith.constant 0 : i32
    return %c0_i32, %c0_i32_0 : i32, i32
  }
  func.func @transform_4(%arg0: i32, %arg1: i32, %arg2: memref<1xi32, #tpu.memory_space<smem>>) -> (i32, i32) {
    %c0_i32 = arith.constant 0 : i32
    %c0_i32_0 = arith.constant 0 : i32
    return %arg0, %c0_i32 : i32, i32
  }
}

</mosaic_0001>

<llo_original>
// kernel: tpu_custom_call.1
$region0: #{tpu_custom_call.1}
  #allocation0 [shape = 'u32[]', space=smem, size = 0x4, offset = 0x4, fixed_abs, tag = 'smem constant byte address 0x4 - core index']
  #allocation1 [shape = 'u32[144,128]{1,0:T(1,128)}', space=vmem, size = 0x12000, scoped, tag = 'internal scratch']
  #allocation2 [shape = 's32[1]{0}', space=sflag, size = 0x4, scoped, tag = 'scoped memory for tpu_custom_call.1']
  #allocation3 [shape = 's32[1]{0:T(128)S(6)}', space=smem, size = 0x200, scoped, tag = 'prefetched SMEM operand 0']
  %s0 = inlined_call_operand.<no memory space> [shape: s32[1], index: 0, kind: input, shape index: {}]
  %s1 = inlined_call_operand.hbm [shape: bf16[8,128], index: 1, kind: input, shape index: {}]
  %s2 = inlined_call_operand.hbm [shape: bf16[128,128], index: 2, kind: input, shape index: {}]
  %s3 = inlined_call_operand.vmem [shape: f32[1,128], index: 3, kind: input, shape index: {}]
  %s4 = inlined_call_operand.vmem [shape: f32[1,128], index: 4, kind: input, shape index: {}]
  %s5 = inlined_call_operand.hbm [shape: f32[8,128], index: 5, kind: output, shape index: {}]
  %s6 = sld [smem:[#allocation0]]
  $region34: #{tpu_custom_call.1} parent=0
    _
  %s8 = ssub.s32 1, %s6
  %s9 = scalar_select 0, %s8, %s6
  %10 = sst [smem:[#allocation3]] %s0
  $region1: #{tpu_custom_call.1} parent=0
    #allocation4 [shape = 'u8[2048]{0}', space=vmem, size = 0x800, scoped, tag = 'input window, operand 1, single buffered']
    #allocation5 [shape = 's32[1]{0}', space=sflag, size = 0x4, scoped, tag = 'scoped memory for tpu_custom_call.1']
    #allocation6 [shape = 's32[1]{0}', space=sflag, size = 0x4, scoped, tag = 'scoped memory for tpu_custom_call.1']
    #allocation7 [shape = 'u8[32768]{0}', space=vmem, size = 0x8000, scoped, tag = 'input window, operand 2, single buffered']
    #allocation8 [shape = 's32[1]{0}', space=sflag, size = 0x4, scoped, tag = 'scoped memory for tpu_custom_call.1']
    #allocation9 [shape = 'u8[4096]{0}', space=vmem, size = 0x1000, scoped, tag = 'output window, operand 0, single buffered']
    %11 = vsyncpa [#allocation5], 0
    %12 = vsyncpa [#allocation8], 0
    %13 = vsyncpa [#allocation6], 0
    // Predicated region
    $region2: #{tpu_custom_call.1} parent=1 // pred_check
      _
    $region3: #{tpu_custom_call.1} parent=1 // pred_check_branch
      %15 = sbr.rel (0) target = $region5
    $region4: #{tpu_custom_call.1} parent=1 // pred_region
      %s17 = ssub.s32 64, 64
      %18 = vsyncadd [#allocation5], %s17
      %s20 = sshll.u32 [#allocation4], 4
      %s21 = int_to_ptr.vmem [resolvable:$true] %s20
      %23 = dma.hbm_to_vmem [thread:$0]  %s1, 64, %s21, [#allocation5]
    $region5: #{tpu_custom_call.1} parent=1 // pred_fallthru
      _
    // Predicated region
    $region6: #{tpu_custom_call.1} parent=1 // pred_check
      _
    $region7: #{tpu_custom_call.1} parent=1 // pred_check_branch
      %25 = sbr.rel (0) target = $region9
    $region8: #{tpu_custom_call.1} parent=1 // pred_region
      %s27 = ssub.s32 1024, 1024
      %28 = vsyncadd [#allocation8], %s27
      %s29 = sshll.u32 [#allocation7], 4
      %s30 = int_to_ptr.vmem [resolvable:$true] %s29
      %35 = dma.hbm_to_vmem [thread:$0]  %s2, 1024, %s30, [#allocation8], 64, 64, 4
    $region9: #{tpu_custom_call.1} parent=1 // pred_fallthru
      _
    // Predicated region
    $region10: #{tpu_custom_call.1} parent=1 // pred_check
      _
    $region11: #{tpu_custom_call.1} parent=1 // pred_check_branch
      %37 = sbr.rel (0) target = $region13
    $region12: #{tpu_custom_call.1} parent=1 // pred_region
      _
    $region13: #{tpu_custom_call.1} parent=1 // pred_fallthru
      _
    // Predicated region
    $region14: #{tpu_custom_call.1} parent=1 // pred_check
      _
    $region15: #{tpu_custom_call.1} parent=1 // pred_check_branch
      %39 = sbr.rel (0) target = $region17
    $region16: #{tpu_custom_call.1} parent=1 // pred_region
      _
    $region17: #{tpu_custom_call.1} parent=1 // pred_fallthru
      _
    // Predicated region
    $region18: #{tpu_custom_call.1} parent=1 // pred_check
      _
    $region19: #{tpu_custom_call.1} parent=1 // pred_check_branch
      %41 = sbr.rel (0) target = $region21
    $region20: #{tpu_custom_call.1} parent=1 // pred_region
      %42 = dma.done [#allocation5], 64
    $region21: #{tpu_custom_call.1} parent=1 // pred_fallthru
      _
    // Predicated region
    $region22: #{tpu_custom_call.1} parent=1 // pred_check
      _
    $region23: #{tpu_custom_call.1} parent=1 // pred_check_branch
      %44 = sbr.rel (0) target = $region25
    $region24: #{tpu_custom_call.1} parent=1 // pred_region
      %45 = dma.done [#allocation8], 1024
    $region25: #{tpu_custom_call.1} parent=1 // pred_fallthru
      _
    %v47 = vld [vmem:[#allocation4] sm:$0xf]
    %v48 = vld [vmem:[#allocation7] sm:$0xf]
    %v49 = vld [vmem:[#allocation7 + $0x4] sm:$0xf]
    %v50 = vld [vmem:[#allocation7 + $0x8] sm:$0xf]
    %v51 = vld [vmem:[#allocation7 + $0xc] sm:$0xf]
    %v52 = vld [vmem:[#allocation7 + $0x10] sm:$0xf]
    %v53 = vld [vmem:[#allocation7 + $0x14] sm:$0xf]
    %v54 = vld [vmem:[#allocation7 + $0x18] sm:$0xf]
    %v55 = vld [vmem:[#allocation7 + $0x1c] sm:$0xf]
    %v56 = vld [vmem:[#allocation7 + $0x20] sm:$0xf]
    %v57 = vld [vmem:[#allocation7 + $0x24] sm:$0xf]
    %v58 = vld [vmem:[#allocation7 + $0x28] sm:$0xf]
    %v59 = vld [vmem:[#allocation7 + $0x2c] sm:$0xf]
    %v60 = vld [vmem:[#allocation7 + $0x30] sm:$0xf]
    %v61 = vld [vmem:[#allocation7 + $0x34] sm:$0xf]
    %v62 = vld [vmem:[#allocation7 + $0x38] sm:$0xf]
    %v63 = vld [vmem:[#allocation7 + $0x3c] sm:$0xf]
    %v80 = vunpack.c.l.b16 %v48
    %v81 = vunpack.c.l.b16 %v49
    %v82 = vunpack.c.l.b16 %v50
    %v83 = vunpack.c.l.b16 %v51
    %v84 = vunpack.c.l.b16 %v52
    %v85 = vunpack.c.l.b16 %v53
    %v86 = vunpack.c.l.b16 %v54
    %v87 = vunpack.c.l.b16 %v55
    %v88 = vunpack.c.l.b16 %v56
    %v89 = vunpack.c.l.b16 %v57
    %v90 = vunpack.c.l.b16 %v58
    %v91 = vunpack.c.l.b16 %v59
    %v92 = vunpack.c.l.b16 %v60
    %v93 = vunpack.c.l.b16 %v61
    %v94 = vunpack.c.l.b16 %v62
    %v95 = vunpack.c.l.b16 %v63
    %v96 = vpack.c.b16 %v81, %v80
    %v97 = vpack.c.b16 %v83, %v82
    %v98 = vpack.c.b16 %v85, %v84
    %v99 = vpack.c.b16 %v87, %v86
    %v100 = vpack.c.b16 %v89, %v88
    %v101 = vpack.c.b16 %v91, %v90
    %v102 = vpack.c.b16 %v93, %v92
    %v103 = vpack.c.b16 %v95, %v94
    %112 = vmatprep.subr.bf16.mxu0 0
    %113 = vmatpush1.bf16.msra.mxu0 %v96
    %114 = vmatprep.subr.bf16.mxu0 0
    %115 = vmatpush1.bf16.msra.mxu0 %v97
    %116 = vmatprep.subr.bf16.mxu0 0
    %117 = vmatpush1.bf16.msra.mxu0 %v98
    %118 = vmatprep.subr.bf16.mxu0 0
    %119 = vmatpush1.bf16.msra.mxu0 %v99
    %120 = vmatprep.subr.bf16.mxu0 0
    %121 = vmatpush1.bf16.msra.mxu0 %v100
    %122 = vmatprep.subr.bf16.mxu0 0
    %123 = vmatpush1.bf16.msra.mxu0 %v101
    %124 = vmatprep.subr.bf16.mxu0 0
    %125 = vmatpush1.bf16.msra.mxu0 %v102
    %126 = vmatprep.subr.bf16.mxu0 0
    %127 = vmatpush1.bf16.msra.mxu0 %v103
    %128 = vmatprep.subr.bf16.mxu0 0
    %129 = vmatpush1.bf16.msra.mxu0 0
    %130 = vmatprep.subr.bf16.mxu0 0
    %131 = vmatpush1.bf16.msra.mxu0 0
    %132 = vmatprep.subr.bf16.mxu0 0
    %133 = vmatpush1.bf16.msra.mxu0 0
    %134 = vmatprep.subr.bf16.mxu0 0
    %135 = vmatpush1.bf16.msra.mxu0 0
    %136 = vmatprep.subr.bf16.mxu0 0
    %137 = vmatpush1.bf16.msra.mxu0 0
    %138 = vmatprep.subr.bf16.mxu0 0
    %139 = vmatpush1.bf16.msra.mxu0 0
    %140 = vmatprep.subr.bf16.mxu0 0
    %141 = vmatpush1.bf16.msra.mxu0 0
    %142 = vmatprep.subr.bf16.mxu0 0
    %143 = vmatpush1.bf16.msra.mxu0 0
    %144 = vmatprep.mubr.bf16.mxu0 0
    %145 = vmatmul.mubr.bf16.gmra.mrb[0].mxu0 %v47
    %v146 = vpop.f32.mrb[0].mxu0
    %v147 = vadd.f32 0.0, %v146
    %v148 = vpop.f32.mrb[0].mxu0
    %v149 = vpop.f32.mrb[0].mxu0
    %v150 = vpop.f32.mrb[0].mxu0
    %151 = vdwg.mxu0
    %152 = vadd.xlane.f32.xlu0 %v147
    %v153 = vpop.xlane.xlu0 %152
    %v154 = vrcp.pop 128.0
    %v155 = vmul.f32 %v153, %v154
    %v156 = vsub.f32 %v147, %v155
    %v157 = vmul.f32 %v156, %v156
    %158 = vadd.xlane.f32.xlu0 %v157
    %v159 = vpop.xlane.xlu0 %158
    %v160 = vmul.f32 %v159, %v154
    %v161 = vadd.f32 %v160, 1e-05
    %v162 = vrsqrt.pop %v161
    %v163 = vmul.f32 %v156, %v162
    %v164 = vld [vmem:[%s3] sm:$0x1]
    %v166 = vlaneseq
    %v167 = vshrl.u32 %v166, 7
    %v168 = vsub.s32 0, %v167
    %v169 = vrot.slane %v164, %v168
    %v171 = vmul.f32 %v163, %v169
    %v172 = vld [vmem:[%s4] sm:$0x1]
    %v174 = vlaneseq
    %v175 = vshrl.u32 %v174, 7
    %v176 = vsub.s32 0, %v175
    %v177 = vrot.slane %v172, %v176
    %v179 = vadd.f32 %v171, %v177
    %v180 = vmax.f32 %v179, 0.0
    %v181 = vlaneseq
    %v182 = vand.u32 %v181, 127
    %s183 = sld [smem:[#allocation3]]
    %v184 = vstv %s183
    %vm185 = vcmp.lt.s32.totalorder %v182, %v184
    %v186 = vsel %vm185, %v180, 0.0
    %187 = vst [vmem:[#allocation9] sm:$0xff] %v186
    // Predicated region
    $region26: #{tpu_custom_call.1} parent=1 // pred_check
      _
    $region27: #{tpu_custom_call.1} parent=1 // pred_check_branch
      %189 = sbr.rel (0) target = $region29
    $region28: #{tpu_custom_call.1} parent=1 // pred_region
      %s191 = ssub.s32 128, 128
      %192 = vsyncadd [#allocation6], %s191
      %s194 = sshll.u32 [#allocation9], 4
      %s195 = int_to_ptr.vmem [resolvable:$true] %s194
      %197 = dma.vmem_to_hbm [thread:$0]  %s195, 128, %s5, [#allocation6]
    $region29: #{tpu_custom_call.1} parent=1 // pred_fallthru
      _
    // Predicated region
    $region30: #{tpu_custom_call.1} parent=1 // pred_check
      _
    $region31: #{tpu_custom_call.1} parent=1 // pred_check_branch
      %199 = sbr.rel (0) target = $region33
    $region32: #{tpu_custom_call.1} parent=1 // pred_region
      %200 = dma.done [#allocation6], 128
    $region33: #{tpu_custom_call.1} parent=1 // pred_fallthru
      _
    %201 = vsyncpa [#allocation5], 1
    %202 = vsyncpa [#allocation8], 1
    %203 = vsyncpa [#allocation6], 1

</llo_original>
